<compile_context>
chip_gen: v5e
topology: v5e:2x2
jax: 0.10.0
libtpu: 0.0.40
codegen_flags: <defaults>
</compile_context>

<pallas_src>
import functools

import jax
import jax.numpy as jnp
from jax.experimental import pallas as pl
from jax.experimental.pallas import tpu as pltpu


# -----------------------------------------------------------------------------
# MADE masks (identical semantics to the PyTorch get_mask; guarded for
# in_flow_features == 1, where torch would raise on modulo-by-zero)
# -----------------------------------------------------------------------------
def get_mask(in_features, out_features, in_flow_features, mask_type=None):
    d = max(in_flow_features - 1, 1)
    if mask_type == "input":
        in_degrees = jnp.arange(in_features) % in_flow_features
    else:
        in_degrees = jnp.arange(in_features) % d
    if mask_type == "output":
        out_degrees = jnp.arange(out_features) % in_flow_features - 1
    else:
        out_degrees = jnp.arange(out_features) % d
    # (out_features, in_features), matches nn.Linear weight layout
    return (out_degrees[:, None] >= in_degrees[None, :]).astype(jnp.float32)


def _round_up(x, m):
    return ((x + m - 1) // m) * m


# -----------------------------------------------------------------------------
# Pallas kernel: full MADE2 forward (direct mode, shift_only=False,
# linear_scale=False) for one batch tile, in transposed (features, batch)
# layout so the batch dimension maps to lanes.
# -----------------------------------------------------------------------------
def made2_kernel(
    xc_ref, wjc_ref, bj_ref, w1_ref, b1_ref, wout_ref, bout_ref,
    u_ref, nega_ref, *, num_inputs, clamp_0, clamp_1,
):
    xc = xc_ref[...]                                             # (Kp, tb)

    # joiner (fused): [Wj*mask | Wc | 0] @ [x ; cond ; 0] + bj, ReLU
    h = jnp.dot(wjc_ref[...], xc, preferred_element_type=jnp.float32)
    h = h + bj_ref[...]                                          # (H,1) bcast
    h = jnp.maximum(h, 0.0)

    # trunk hidden layer: masked W1 @ h + b1, ReLU
    h = jnp.dot(w1_ref[...], h.astype(w1_ref.dtype),
                preferred_element_type=jnp.float32) + b1_ref[...]
    h = jnp.maximum(h, 0.0)

    # fused output layer: masked W2 @ h + b2 -> (2*Din, tb) f32, then a static
    # sublane split (Din is a multiple of 8 here, so the slice is free).
    out = jnp.dot(wout_ref[...], h.astype(wout_ref.dtype),
                  preferred_element_type=jnp.float32) + bout_ref[...]
    m = out[:num_inputs, :]
    a = jnp.clip(out[num_inputs:, :], clamp_0, clamp_1)

    x32 = xc[:num_inputs, :].astype(jnp.float32)
    u_ref[...] = ((x32 - m) * jnp.exp(-a)).astype(u_ref.dtype)
    nega_ref[...] = (-a).astype(nega_ref.dtype)


# -----------------------------------------------------------------------------
# Batch-tile selection: multiple of 256 (v6e/v7x MXU N width), capped by the
# padded batch, and kept to >=2 grid steps when the batch allows it so v7x's
# two TensorCores both get work via dimension_semantics=("parallel",).
# -----------------------------------------------------------------------------
def _pick_block(B, block_b):
    bp_min = _round_up(B, 256)
    blk = max(256, _round_up(min(block_b, bp_min), 256))
    if bp_min // blk < 2 and bp_min >= 512:
        blk = max(256, _round_up(bp_min // 2, 256))
    return blk


# -----------------------------------------------------------------------------
# Transposed-layout entry point: xT (Din, B), condT (C, B) -> u, -a as
# (Din, B). Chained flow layers should call this directly and stay in
# (features, batch) layout to avoid transpose copies at every layer.
# -----------------------------------------------------------------------------
def made2_forward_t(xT, condT, params, *, clamp_0=-2.0, clamp_1=3.0,
                    block_b=2048, io_dtype=jnp.bfloat16,
                    out_dtype=jnp.float32):
    Din, B = xT.shape
    C = condT.shape[0]
    H = params["Wj"].shape[0]
    out_dims = params["W2"].shape[0]          # 2 * Din
    assert out_dims == 2 * Din
    f32 = jnp.float32

    # Masks (same construction as MADE2.__init__)
    input_mask = get_mask(Din, H, Din, mask_type="input")          # (H, Din)
    hidden_mask = get_mask(H, H, Din)                              # (H, H)
    output_mask = get_mask(H, out_dims, Din, mask_type="output")   # (2Din, H)

    # Fused, pre-masked joiner weight [Wj*mask | Wc | 0] padded to Kp rows
    # (Kp multiple of 16 -> fully packed bf16 sublane tiles for the input slab).
    Kin = Din + C
    Kp = _round_up(max(Kin, 8), 16)
    wjc = jnp.zeros((H, Kp), f32)
    wjc = wjc.at[:, :Din].set(params["Wj"] * input_mask)
    wjc = wjc.at[:, Din:Kin].set(params["Wc"])
    wjc = wjc.astype(io_dtype)

    w1 = (params["W1"] * hidden_mask).astype(io_dtype)             # (H, H)
    wout = (params["W2"] * output_mask).astype(io_dtype)           # (2Din, H)

    # Biases stay f32 (added post-accumulation), as column vectors.
    bj = params["bj"].reshape(H, 1).astype(f32)
    b1 = params["b1"].reshape(H, 1).astype(f32)
    bout = params["b2"].reshape(out_dims, 1).astype(f32)

    # Batch tile + ragged-tail zero padding, fused [x ; cond ; 0] input slab.
    blk = _pick_block(B, block_b)
    Bp = _round_up(B, blk)
    xc = jnp.zeros((Kp, Bp), io_dtype)
    xc = xc.at[:Din, :B].set(xT.astype(io_dtype))
    xc = xc.at[Din:Kin, :B].set(condT.astype(io_dtype))

    grid = (Bp // blk,)
    kernel = functools.partial(
        made2_kernel, num_inputs=Din,
        clamp_0=float(clamp_0), clamp_1=float(clamp_1),
    )
    const = lambda shape: pl.BlockSpec(shape, lambda i: (0, 0))

    u_pad, nega_pad = pl.pallas_call(
        kernel,
        out_shape=(jax.ShapeDtypeStruct((Din, Bp), out_dtype),
                   jax.ShapeDtypeStruct((Din, Bp), out_dtype)),
        grid_spec=pltpu.PrefetchScalarGridSpec(
            num_scalar_prefetch=0,
            grid=grid,
            in_specs=[
                pl.BlockSpec((Kp, blk), lambda i: (0, i)),      # [x;cond] slab
                const((H, Kp)),                                 # wjc
                const((H, 1)),                                  # bj
                const((H, H)),                                  # w1
                const((H, 1)),                                  # b1
                const((out_dims, H)),                           # wout
                const((out_dims, 1)),                           # bout
            ],
            out_specs=[
                pl.BlockSpec((Din, blk), lambda i: (0, i)),     # u
                pl.BlockSpec((Din, blk), lambda i: (0, i)),     # -a
            ],
        ),
        compiler_params=pltpu.CompilerParams(
            dimension_semantics=("parallel",)
        ),
    )(xc, wjc, bj, w1, b1, wout, bout)

    return u_pad[:, :B], nega_pad[:, :B]


# -----------------------------------------------------------------------------
# PyTorch-style API: x (B, Din), cond (B, C) -> u, -a as (B, Din).
# -----------------------------------------------------------------------------
def made2_forward(x, cond, params, *, clamp_0=-2.0, clamp_1=3.0,
                  block_b=2048, io_dtype=jnp.bfloat16, out_dtype=jnp.float32):
    u_t, nega_t = made2_forward_t(
        x.T, cond.T, params, clamp_0=clamp_0, clamp_1=clamp_1,
        block_b=block_b, io_dtype=io_dtype, out_dtype=out_dtype)
    return u_t.T, nega_t.T


# -----------------------------------------------------------------------------
# Pure-JAX reference. io_dtype/out_dtype=float32 -> exact PyTorch module
# semantics; bfloat16 -> same quantization the bf16 kernel path applies.
# -----------------------------------------------------------------------------
def made2_reference(x, cond, params, *, clamp_0=-2.0, clamp_1=3.0,
                    io_dtype=jnp.float32, out_dtype=jnp.float32):
    Din = x.shape[1]
    H = params["Wj"].shape[0]
    out_dims = params["W2"].shape[0]
    f32 = jnp.float32
    input_mask = get_mask(Din, H, Din, mask_type="input")
    hidden_mask = get_mask(H, H, Din)
    output_mask = get_mask(H, out_dims, Din, mask_type="output")

    wj = (params["Wj"] * input_mask).astype(io_dtype)
    wc = params["Wc"].astype(io_dtype)
    w1 = (params["W1"] * hidden_mask).astype(io_dtype)
    w2 = (params["W2"] * output_mask).astype(io_dtype)
    xq = x.astype(io_dtype)
    cq = cond.astype(io_dtype)

    h = (jnp.dot(xq, wj.T, preferred_element_type=f32)
         + jnp.dot(cq, wc.T, preferred_element_type=f32)
         + params["bj"])
    h = jnp.maximum(h, 0.0)
    h = jnp.dot(h.astype(io_dtype), w1.T, preferred_element_type=f32) + params["b1"]
    h = jnp.maximum(h, 0.0)
    out = jnp.dot(h.astype(io_dtype), w2.T, preferred_element_type=f32) + params["b2"]
    m, a = out[:, :Din], out[:, Din:]
    a = jnp.clip(a, clamp_0, clamp_1)
    u = (xq.astype(f32) - m) * jnp.exp(-a)
    neg_a = -a
    return (u.astype(out_dtype).astype(f32),
            neg_a.astype(out_dtype).astype(f32))


# -----------------------------------------------------------------------------
# Deterministic parameter init (PyTorch nn.Linear-style uniform bounds)
# -----------------------------------------------------------------------------
def init_params(key, num_inputs, num_hidden, num_cond, dtype=jnp.float32):
    out_dims = 2 * num_inputs
    ks = jax.random.split(key, 7)

    def uni(k, shape, fan_in):
        bound = 1.0 / (fan_in ** 0.5)
        return jax.random.uniform(k, shape, dtype, minval=-bound, maxval=bound)

    return {
        "Wj": uni(ks[0], (num_hidden, num_inputs), num_inputs),
        "bj": uni(ks[1], (num_hidden,), num_inputs),
        "Wc": uni(ks[2], (num_hidden, num_cond), num_cond),
        "W1": uni(ks[3], (num_hidden, num_hidden), num_hidden),
        "b1": uni(ks[4], (num_hidden,), num_hidden),
        "W2": uni(ks[5], (out_dims, num_hidden), num_hidden),
        "b2": uni(ks[6], (out_dims,), num_hidden),
    }


if __name__ == "__main__":
    num_inputs, num_hidden, num_cond = 8, 32, 4
    batch = 200          # deliberately ragged: wrapper pads to the batch tile

    key = jax.random.PRNGKey(0)
    kx, kc, kp = jax.random.split(key, 3)
    x = jax.random.normal(kx, (batch, num_inputs), jnp.float32)
    cond = jax.random.normal(kc, (batch, num_cond), jnp.float32)
    params = init_params(kp, num_inputs, num_hidden, num_cond)

    # 1) f32 I/O path: exact semantics of the PyTorch module.
    u, neg_a = made2_forward(x, cond, params,
                             io_dtype=jnp.float32, out_dtype=jnp.float32)
    u = jax.block_until_ready(u)
    neg_a = jax.block_until_ready(neg_a)
    u_ref, na_ref = made2_reference(x, cond, params)
    assert jnp.allclose(u, u_ref, atol=1e-4, rtol=1e-4), "u mismatch (f32)"
    assert jnp.allclose(neg_a, na_ref, atol=1e-4, rtol=1e-4), "-a mismatch (f32)"

    # 2) bf16 I/O + bf16 output path (minimal HBM traffic on a mem-bound
    #    kernel); compare against a reference applying the same bf16
    #    quantization with f32 accumulation.
    u_bf, na_bf = made2_forward(x, cond, params,
                                io_dtype=jnp.bfloat16, out_dtype=jnp.bfloat16)
    u_bf = jax.block_until_ready(u_bf)
    na_bf = jax.block_until_ready(na_bf)
    u_qref, na_qref = made2_reference(x, cond, params,
                                      io_dtype=jnp.bfloat16,
                                      out_dtype=jnp.bfloat16)
    assert jnp.allclose(u_bf.astype(jnp.float32), u_qref,
                        atol=3e-2, rtol=3e-2), "u mismatch (bf16)"
    assert jnp.allclose(na_bf.astype(jnp.float32), na_qref,
                        atol=3e-2, rtol=3e-2), "-a mismatch (bf16)"

    # TODO(synk): 'inverse' mode (sequential per-column Gauss-Seidel loop over
    # features) is inherently serial and is not implemented as a kernel here.
    # TODO(synk): shift_only / linear_scale / cond_inputs=None variants are not
    # covered by this kernel.
    print("KERNEL_OK")
</pallas_src>

<mosaic_0001>
module attributes {stable_mosaic.version = 11 : i64} {
  func.func @made2_kernel(%arg0: i32, %arg1: memref<16x256xf32, #tpu.memory_space<vmem>>, %arg2: memref<32x16xf32, #tpu.memory_space<vmem>>, %arg3: memref<32x1xf32, #tpu.memory_space<vmem>>, %arg4: memref<32x32xf32, #tpu.memory_space<vmem>>, %arg5: memref<32x1xf32, #tpu.memory_space<vmem>>, %arg6: memref<16x32xf32, #tpu.memory_space<vmem>>, %arg7: memref<16x1xf32, #tpu.memory_space<vmem>>, %arg8: memref<8x256xf32, #tpu.memory_space<vmem>>, %arg9: memref<8x256xf32, #tpu.memory_space<vmem>>) attributes {dimension_semantics = [#tpu.dimension_semantics<parallel>], iteration_bounds = array<i64: 1>, scalar_prefetch = 0 : i64, scratch_operands = 0 : i64, tpu.core_type = #tpu.core_type<tc>, window_params = [{transform_indices = @transform_0, window_bounds = array<i64: 16, 256>}, {pipeline_mode = #tpu.pipeline_mode<synchronous>, transform_indices = @transform_1, window_bounds = array<i64: 32, 16>}, {pipeline_mode = #tpu.pipeline_mode<synchronous>, transform_indices = @transform_2, window_bounds = array<i64: 32, 1>}, {pipeline_mode = #tpu.pipeline_mode<synchronous>, transform_indices = @transform_3, window_bounds = array<i64: 32, 32>}, {pipeline_mode = #tpu.pipeline_mode<synchronous>, transform_indices = @transform_4, window_bounds = array<i64: 32, 1>}, {pipeline_mode = #tpu.pipeline_mode<synchronous>, transform_indices = @transform_5, window_bounds = array<i64: 16, 32>}, {pipeline_mode = #tpu.pipeline_mode<synchronous>, transform_indices = @transform_6, window_bounds = array<i64: 16, 1>}, {transform_indices = @transform_7, window_bounds = array<i64: 8, 256>}, {transform_indices = @transform_8, window_bounds = array<i64: 8, 256>}]} {
    %c0 = arith.constant 0 : index
    %c0_0 = arith.constant 0 : index
    %0 = vector.load %arg1[%c0, %c0_0] : memref<16x256xf32, #tpu.memory_space<vmem>>, vector<16x256xf32>
    %c0_1 = arith.constant 0 : index
    %c0_2 = arith.constant 0 : index
    %1 = vector.load %arg2[%c0_1, %c0_2] : memref<32x16xf32, #tpu.memory_space<vmem>>, vector<32x16xf32>
    %cst = arith.constant dense<0.000000e+00> : vector<32x256xf32>
    %2 = tpu.matmul %1, %0, %cst {dimension_numbers = #tpu.dot_dimension_numbers<[1], [0], [0], [1], [0, 0, 1, 1], [], []>} : vector<32x16xf32>, vector<16x256xf32>, vector<32x256xf32> -> vector<32x256xf32>
    %c0_3 = arith.constant 0 : index
    %c0_4 = arith.constant 0 : index
    %3 = vector.load %arg3[%c0_3, %c0_4] : memref<32x1xf32, #tpu.memory_space<vmem>>, vector<32x1xf32>
    %4 = vector.broadcast %3 : vector<32x1xf32> to vector<32x256xf32>
    %5 = arith.addf %2, %4 : vector<32x256xf32>
    %cst_5 = arith.constant 0.000000e+00 : f32
    %6 = vector.broadcast %cst_5 : f32 to vector<32x256xf32>
    %7 = arith.maximumf %5, %6 : vector<32x256xf32>
    %c0_6 = arith.constant 0 : index
    %c0_7 = arith.constant 0 : index
    %8 = vector.load %arg4[%c0_6, %c0_7] : memref<32x32xf32, #tpu.memory_space<vmem>>, vector<32x32xf32>
    %cst_8 = arith.constant dense<0.000000e+00> : vector<32x256xf32>
    %9 = tpu.matmul %8, %7, %cst_8 {dimension_numbers = #tpu.dot_dimension_numbers<[1], [0], [0], [1], [0, 0, 1, 1], [], []>} : vector<32x32xf32>, vector<32x256xf32>, vector<32x256xf32> -> vector<32x256xf32>
    %c0_9 = arith.constant 0 : index
    %c0_10 = arith.constant 0 : index
    %10 = vector.load %arg5[%c0_9, %c0_10] : memref<32x1xf32, #tpu.memory_space<vmem>>, vector<32x1xf32>
    %11 = vector.broadcast %10 : vector<32x1xf32> to vector<32x256xf32>
    %12 = arith.addf %9, %11 : vector<32x256xf32>
    %cst_11 = arith.constant 0.000000e+00 : f32
    %13 = vector.broadcast %cst_11 : f32 to vector<32x256xf32>
    %14 = arith.maximumf %12, %13 : vector<32x256xf32>
    %c0_12 = arith.constant 0 : index
    %c0_13 = arith.constant 0 : index
    %15 = vector.load %arg6[%c0_12, %c0_13] : memref<16x32xf32, #tpu.memory_space<vmem>>, vector<16x32xf32>
    %cst_14 = arith.constant dense<0.000000e+00> : vector<16x256xf32>
    %16 = tpu.matmul %15, %14, %cst_14 {dimension_numbers = #tpu.dot_dimension_numbers<[1], [0], [0], [1], [0, 0, 1, 1], [], []>} : vector<16x32xf32>, vector<32x256xf32>, vector<16x256xf32> -> vector<16x256xf32>
    %c0_15 = arith.constant 0 : index
    %c0_16 = arith.constant 0 : index
    %17 = vector.load %arg7[%c0_15, %c0_16] : memref<16x1xf32, #tpu.memory_space<vmem>>, vector<16x1xf32>
    %18 = vector.broadcast %17 : vector<16x1xf32> to vector<16x256xf32>
    %19 = arith.addf %16, %18 : vector<16x256xf32>
    %20 = vector.extract_strided_slice %19 {offsets = [0, 0], sizes = [8, 256], strides = [1, 1]} : vector<16x256xf32> to vector<8x256xf32>
    %21 = vector.extract_strided_slice %19 {offsets = [8, 0], sizes = [8, 256], strides = [1, 1]} : vector<16x256xf32> to vector<8x256xf32>
    %cst_17 = arith.constant -2.000000e+00 : f32
    %cst_18 = arith.constant 3.000000e+00 : f32
    %22 = vector.broadcast %cst_17 : f32 to vector<8x256xf32>
    %23 = arith.maximumf %22, %21 : vector<8x256xf32>
    %24 = vector.broadcast %cst_18 : f32 to vector<8x256xf32>
    %25 = arith.minimumf %24, %23 : vector<8x256xf32>
    %26 = vector.extract_strided_slice %0 {offsets = [0, 0], sizes = [8, 256], strides = [1, 1]} : vector<16x256xf32> to vector<8x256xf32>
    %27 = arith.subf %26, %20 : vector<8x256xf32>
    %cst_19 = arith.constant 0.000000e+00 : f32
    %28 = vector.broadcast %cst_19 : f32 to vector<8x256xf32>
    %29 = arith.subf %28, %25 : vector<8x256xf32>
    %30 = math.exp %29 : vector<8x256xf32>
    %31 = arith.mulf %27, %30 : vector<8x256xf32>
    %c0_20 = arith.constant 0 : index
    %c0_21 = arith.constant 0 : index
    %32 = vector.load %arg8[%c0_20, %c0_21] : memref<8x256xf32, #tpu.memory_space<vmem>>, vector<8x256xf32>
    tpu.vector_store %arg8[%c0_20, %c0_21], %31 {strides = array<i32>} : memref<8x256xf32, #tpu.memory_space<vmem>>, vector<8x256xf32>,
    %cst_22 = arith.constant 0.000000e+00 : f32
    %33 = vector.broadcast %cst_22 : f32 to vector<8x256xf32>
    %34 = arith.subf %33, %25 : vector<8x256xf32>
    %c0_23 = arith.constant 0 : index
    %c0_24 = arith.constant 0 : index
    %35 = vector.load %arg9[%c0_23, %c0_24] : memref<8x256xf32, #tpu.memory_space<vmem>>, vector<8x256xf32>
    tpu.vector_store %arg9[%c0_23, %c0_24], %34 {strides = array<i32>} : memref<8x256xf32, #tpu.memory_space<vmem>>, vector<8x256xf32>,
    return
  }
  func.func @transform_0(%arg0: i32) -> (i32, i32) {
    %c0_i32 = arith.constant 0 : i32
    %c0_i32_0 = arith.constant 0 : i32
    return %c0_i32, %arg0 : i32, i32
  }
  func.func @transform_1(%arg0: i32) -> (i32, i32) {
    %c0_i32 = arith.constant 0 : i32
    %c0_i32_0 = arith.constant 0 : i32
    %c0_i32_1 = arith.constant 0 : i32
    return %c0_i32, %c0_i32_0 : i32, i32
  }
  func.func @transform_2(%arg0: i32) -> (i32, i32) {
    %c0_i32 = arith.constant 0 : i32
    %c0_i32_0 = arith.constant 0 : i32
    %c0_i32_1 = arith.constant 0 : i32
    return %c0_i32, %c0_i32_0 : i32, i32
  }
  func.func @transform_3(%arg0: i32) -> (i32, i32) {
    %c0_i32 = arith.constant 0 : i32
    %c0_i32_0 = arith.constant 0 : i32
    %c0_i32_1 = arith.constant 0 : i32
    return %c0_i32, %c0_i32_0 : i32, i32
  }
  func.func @transform_4(%arg0: i32) -> (i32, i32) {
    %c0_i32 = arith.constant 0 : i32
    %c0_i32_0 = arith.constant 0 : i32
    %c0_i32_1 = arith.constant 0 : i32
    return %c0_i32, %c0_i32_0 : i32, i32
  }
  func.func @transform_5(%arg0: i32) -> (i32, i32) {
    %c0_i32 = arith.constant 0 : i32
    %c0_i32_0 = arith.constant 0 : i32
    %c0_i32_1 = arith.constant 0 : i32
    return %c0_i32, %c0_i32_0 : i32, i32
  }
  func.func @transform_6(%arg0: i32) -> (i32, i32) {
    %c0_i32 = arith.constant 0 : i32
    %c0_i32_0 = arith.constant 0 : i32
    %c0_i32_1 = arith.constant 0 : i32
    return %c0_i32, %c0_i32_0 : i32, i32
  }
  func.func @transform_7(%arg0: i32) -> (i32, i32) {
    %c0_i32 = arith.constant 0 : i32
    %c0_i32_0 = arith.constant 0 : i32
    return %c0_i32, %arg0 : i32, i32
  }
  func.func @transform_8(%arg0: i32) -> (i32, i32) {
    %c0_i32 = arith.constant 0 : i32
    %c0_i32_0 = arith.constant 0 : i32
    return %c0_i32, %arg0 : i32, i32
  }
}

</mosaic_0001>

<llo_original>
// kernel: tpu_custom_call.1
$region0: #{tpu_custom_call.1}
  #allocation0 [shape = 'u32[]', space=smem, size = 0x4, offset = 0x4, fixed_abs, tag = 'smem constant byte address 0x4 - core index']
  #allocation1 [shape = 'u32[72,128]{1,0:T(1,128)}', space=vmem, size = 0x9000, scoped, tag = 'internal scratch']
  %s0 = inlined_call_operand.vmem [shape: f32[16,256], index: 0, kind: input, shape index: {}]
  %s1 = inlined_call_operand.vmem [shape: f32[32,16], index: 1, kind: input, shape index: {}]
  %s2 = inlined_call_operand.vmem [shape: f32[32,1], index: 2, kind: input, shape index: {}]
  %s3 = inlined_call_operand.vmem [shape: f32[32,32], index: 3, kind: input, shape index: {}]
  %s4 = inlined_call_operand.vmem [shape: f32[32,1], index: 4, kind: input, shape index: {}]
  %s5 = inlined_call_operand.vmem [shape: f32[16,32], index: 5, kind: input, shape index: {}]
  %s6 = inlined_call_operand.vmem [shape: f32[16,1], index: 6, kind: input, shape index: {}]
  %s7 = inlined_call_operand.hbm [shape: f32[8,256], index: 7, kind: output, shape index: {0}]
  %s8 = inlined_call_operand.hbm [shape: f32[8,256], index: 8, kind: output, shape index: {1}]
  %9 = xla_tuple %s7, %s8
  %s10 = sld [smem:[#allocation0]]
  $region46: #{tpu_custom_call.1} parent=0
    _
  %s12 = ssub.s32 1, %s10
  %s13 = scalar_select 0, %s12, %s10
  $region1: #{tpu_custom_call.1} parent=0
    #allocation2 [shape = 'u8[8192]{0}', space=vmem, size = 0x2000, scoped, tag = 'output window, operand 0, single buffered']
    #allocation3 [shape = 's32[1]{0}', space=sflag, size = 0x4, scoped, tag = 'scoped memory for tpu_custom_call.1']
    #allocation4 [shape = 'u8[8192]{0}', space=vmem, size = 0x2000, scoped, tag = 'output window, operand 1, single buffered']
    #allocation5 [shape = 's32[1]{0}', space=sflag, size = 0x4, scoped, tag = 'scoped memory for tpu_custom_call.1']
    %14 = vsyncpa [#allocation3], 0
    %15 = vsyncpa [#allocation5], 0
    // Predicated region
    $region2: #{tpu_custom_call.1} parent=1 // pred_check
      _
    $region3: #{tpu_custom_call.1} parent=1 // pred_check_branch
      %17 = sbr.rel (0) target = $region5
    $region4: #{tpu_custom_call.1} parent=1 // pred_region
      _
    $region5: #{tpu_custom_call.1} parent=1 // pred_fallthru
      _
    // Predicated region
    $region6: #{tpu_custom_call.1} parent=1 // pred_check
      _
    $region7: #{tpu_custom_call.1} parent=1 // pred_check_branch
      %19 = sbr.rel (0) target = $region9
    $region8: #{tpu_custom_call.1} parent=1 // pred_region
      _
    $region9: #{tpu_custom_call.1} parent=1 // pred_fallthru
      _
    // Predicated region
    $region10: #{tpu_custom_call.1} parent=1 // pred_check
      _
    $region11: #{tpu_custom_call.1} parent=1 // pred_check_branch
      %21 = sbr.rel (0) target = $region13
    $region12: #{tpu_custom_call.1} parent=1 // pred_region
      _
    $region13: #{tpu_custom_call.1} parent=1 // pred_fallthru
      _
    // Predicated region
    $region14: #{tpu_custom_call.1} parent=1 // pred_check
      _
    $region15: #{tpu_custom_call.1} parent=1 // pred_check_branch
      %23 = sbr.rel (0) target = $region17
    $region16: #{tpu_custom_call.1} parent=1 // pred_region
      _
    $region17: #{tpu_custom_call.1} parent=1 // pred_fallthru
      _
    // Predicated region
    $region18: #{tpu_custom_call.1} parent=1 // pred_check
      _
    $region19: #{tpu_custom_call.1} parent=1 // pred_check_branch
      %25 = sbr.rel (0) target = $region21
    $region20: #{tpu_custom_call.1} parent=1 // pred_region
      _
    $region21: #{tpu_custom_call.1} parent=1 // pred_fallthru
      _
    // Predicated region
    $region22: #{tpu_custom_call.1} parent=1 // pred_check
      _
    $region23: #{tpu_custom_call.1} parent=1 // pred_check_branch
      %27 = sbr.rel (0) target = $region25
    $region24: #{tpu_custom_call.1} parent=1 // pred_region
      _
    $region25: #{tpu_custom_call.1} parent=1 // pred_fallthru
      _
    // Predicated region
    $region26: #{tpu_custom_call.1} parent=1 // pred_check
      _
    $region27: #{tpu_custom_call.1} parent=1 // pred_check_branch
      %29 = sbr.rel (0) target = $region29
    $region28: #{tpu_custom_call.1} parent=1 // pred_region
      _
    $region29: #{tpu_custom_call.1} parent=1 // pred_fallthru
      _
    %v30 = vld [vmem:[%s0] sm:$0xff]
    %v31 = vld [vmem:[%s0 + $0x8] sm:$0xff]
    %v32 = vld [vmem:[%s0 + $0x10] sm:$0xff]
    %v33 = vld [vmem:[%s0 + $0x18] sm:$0xff]
    %v34 = vld [vmem:[%s1] sm:$0xff]
    %v35 = vld [vmem:[%s1 + $0x8] sm:$0xff]
    %v36 = vld [vmem:[%s1 + $0x10] sm:$0xff]
    %v37 = vld [vmem:[%s1 + $0x18] sm:$0xff]
    %v38 = vld [vmem:[%s2] sm:$0xff]
    %v39 = vld [vmem:[%s2 + $0x8] sm:$0xff]
    %v40 = vld [vmem:[%s2 + $0x10] sm:$0xff]
    %v41 = vld [vmem:[%s2 + $0x18] sm:$0xff]
    %43 = vset.pattern.permute.xlu0 0
    %44 = vperm.xlu0 %43, %v38
    %v45 = vpop.permute.xlu0 %44
    %48 = vset.pattern.permute.xlu0 0
    %49 = vperm.xlu0 %48, %v39
    %v50 = vpop.permute.xlu0 %49
    %53 = vset.pattern.permute.xlu0 0
    %54 = vperm.xlu0 %53, %v40
    %v55 = vpop.permute.xlu0 %54
    %58 = vset.pattern.permute.xlu0 0
    %59 = vperm.xlu0 %58, %v41
    %v60 = vpop.permute.xlu0 %59
    %vm62 = vcmask 130048
    %v64 = vsel %vm62, %v34, 0
    %v67 = vsel %vm62, %v35, 0
    %v70 = vsel %vm62, %v36, 0
    %v73 = vsel %vm62, %v37, 0
    %75 = vmatpush.msra.mxu0 0.0
    %76 = vmatpush.msra.mxu0 0.0
    %77 = vmatpush.msra.mxu0 0.0
    %78 = vmatpush.msra.mxu0 0.0
    %79 = vmatpush.msra.mxu0 0.0
    %80 = vmatpush.msra.mxu0 0.0
    %81 = vmatpush.msra.mxu0 0.0
    %82 = vmatpush.msra.mxu0 0.0
    %83 = vmatpush.msra.mxu0 0.0
    %84 = vmatpush.msra.mxu0 0.0
    %85 = vmatpush.msra.mxu0 0.0
    %86 = vmatpush.msra.mxu0 0.0
    %87 = vmatpush.msra.mxu0 0.0
    %88 = vmatpush.msra.mxu0 0.0
    %89 = vmatpush.msra.mxu0 %v32
    %90 = vmatpush.msra.mxu0 %v30
    %91 = vmatmul.f32.gmra.mxu0 %v64
    %v92 = vpop.f32.mrf.mxu0
    %v93 = vadd.f32 %v45, %v92
    %94 = vmatmul.f32.gmra.mxu0 %v67
    %v95 = vpop.f32.mrf.mxu0
    %v96 = vadd.f32 %v50, %v95
    %97 = vmatmul.f32.gmra.mxu0 %v70
    %v98 = vpop.f32.mrf.mxu0
    %v99 = vadd.f32 %v55, %v98
    %100 = vmatmul.f32.gmra.mxu0 %v73
    %v101 = vpop.f32.mrf.mxu0
    %v102 = vadd.f32 %v60, %v101
    %103 = vdwg.mxu0
    %104 = vmatpush.msra.mxu0 0.0
    %105 = vmatpush.msra.mxu0 0.0
    %106 = vmatpush.msra.mxu0 0.0
    %107 = vmatpush.msra.mxu0 0.0
    %108 = vmatpush.msra.mxu0 0.0
    %109 = vmatpush.msra.mxu0 0.0
    %110 = vmatpush.msra.mxu0 0.0
    %111 = vmatpush.msra.mxu0 0.0
    %112 = vmatpush.msra.mxu0 0.0
    %113 = vmatpush.msra.mxu0 0.0
    %114 = vmatpush.msra.mxu0 0.0
    %115 = vmatpush.msra.mxu0 0.0
    %116 = vmatpush.msra.mxu0 0.0
    %117 = vmatpush.msra.mxu0 0.0
    %118 = vmatpush.msra.mxu0 %v33
    %119 = vmatpush.msra.mxu0 %v31
    %120 = vmatmul.f32.gmra.mxu0 %v64
    %v121 = vpop.f32.mrf.mxu0
    %v122 = vadd.f32 %v45, %v121
    %123 = vmatmul.f32.gmra.mxu0 %v67
    %v124 = vpop.f32.mrf.mxu0
    %v125 = vadd.f32 %v50, %v124
    %126 = vmatmul.f32.gmra.mxu0 %v70
    %v127 = vpop.f32.mrf.mxu0
    %v128 = vadd.f32 %v55, %v127
    %129 = vmatmul.f32.gmra.mxu0 %v73
    %v130 = vpop.f32.mrf.mxu0
    %v131 = vadd.f32 %v60, %v130
    %132 = vdwg.mxu0
    %v133 = vmax.f32 %v93, 0.0
    %v134 = vmax.f32 %v122, 0.0
    %v135 = vmax.f32 %v96, 0.0
    %v136 = vmax.f32 %v125, 0.0
    %v137 = vmax.f32 %v99, 0.0
    %v138 = vmax.f32 %v128, 0.0
    %v139 = vmax.f32 %v102, 0.0
    %v140 = vmax.f32 %v131, 0.0
    %v141 = vld [vmem:[%s3] sm:$0xff]
    %v142 = vld [vmem:[%s3 + $0x8] sm:$0xff]
    %v143 = vld [vmem:[%s3 + $0x10] sm:$0xff]
    %v144 = vld [vmem:[%s3 + $0x18] sm:$0xff]
    %v145 = vld [vmem:[%s4] sm:$0xff]
    %v146 = vld [vmem:[%s4 + $0x8] sm:$0xff]
    %v147 = vld [vmem:[%s4 + $0x10] sm:$0xff]
    %v148 = vld [vmem:[%s4 + $0x18] sm:$0xff]
    %150 = vset.pattern.permute.xlu0 0
    %151 = vperm.xlu0 %150, %v145
    %v152 = vpop.permute.xlu0 %151
    %155 = vset.pattern.permute.xlu0 0
    %156 = vperm.xlu0 %155, %v146
    %v157 = vpop.permute.xlu0 %156
    %160 = vset.pattern.permute.xlu0 0
    %161 = vperm.xlu0 %160, %v147
    %v162 = vpop.permute.xlu0 %161
    %165 = vset.pattern.permute.xlu0 0
    %166 = vperm.xlu0 %165, %v148
    %v167 = vpop.permute.xlu0 %166
    %vm169 = vcmask 261120
    %v171 = vsel %vm169, %v141, 0
    %v174 = vsel %vm169, %v142, 0
    %v177 = vsel %vm169, %v143, 0
    %v180 = vsel %vm169, %v144, 0
    %182 = vmatpush.msra.mxu0 0.0
    %183 = vmatpush.msra.mxu0 0.0
    %184 = vmatpush.msra.mxu0 0.0
    %185 = vmatpush.msra.mxu0 0.0
    %186 = vmatpush.msra.mxu0 0.0
    %187 = vmatpush.msra.mxu0 0.0
    %188 = vmatpush.msra.mxu0 0.0
    %189 = vmatpush.msra.mxu0 0.0
    %190 = vmatpush.msra.mxu0 0.0
    %191 = vmatpush.msra.mxu0 0.0
    %192 = vmatpush.msra.mxu0 0.0
    %193 = vmatpush.msra.mxu0 0.0
    %194 = vmatpush.msra.mxu0 %v139
    %195 = vmatpush.msra.mxu0 %v137
    %196 = vmatpush.msra.mxu0 %v135
    %197 = vmatpush.msra.mxu0 %v133
    %198 = vmatmul.f32.gmra.mxu0 %v171
    %v199 = vpop.f32.mrf.mxu0
    %v200 = vadd.f32 %v152, %v199
    %201 = vmatmul.f32.gmra.mxu0 %v174
    %v202 = vpop.f32.mrf.mxu0
    %v203 = vadd.f32 %v157, %v202
    %204 = vmatmul.f32.gmra.mxu0 %v177
    %v205 = vpop.f32.mrf.mxu0
    %v206 = vadd.f32 %v162, %v205
    %207 = vmatmul.f32.gmra.mxu0 %v180
    %v208 = vpop.f32.mrf.mxu0
    %v209 = vadd.f32 %v167, %v208
    %210 = vdwg.mxu0
    %211 = vmatpush.msra.mxu0 0.0
    %212 = vmatpush.msra.mxu0 0.0
    %213 = vmatpush.msra.mxu0 0.0
    %214 = vmatpush.msra.mxu0 0.0
    %215 = vmatpush.msra.mxu0 0.0
    %216 = vmatpush.msra.mxu0 0.0
    %217 = vmatpush.msra.mxu0 0.0
    %218 = vmatpush.msra.mxu0 0.0
    %219 = vmatpush.msra.mxu0 0.0
    %220 = vmatpush.msra.mxu0 0.0
    %221 = vmatpush.msra.mxu0 0.0
    %222 = vmatpush.msra.mxu0 0.0
    %223 = vmatpush.msra.mxu0 %v140
    %224 = vmatpush.msra.mxu0 %v138
    %225 = vmatpush.msra.mxu0 %v136
    %226 = vmatpush.msra.mxu0 %v134
    %227 = vmatmul.f32.gmra.mxu0 %v171
    %v228 = vpop.f32.mrf.mxu0
    %v229 = vadd.f32 %v152, %v228
    %230 = vmatmul.f32.gmra.mxu0 %v174
    %v231 = vpop.f32.mrf.mxu0
    %v232 = vadd.f32 %v157, %v231
    %233 = vmatmul.f32.gmra.mxu0 %v177
    %v234 = vpop.f32.mrf.mxu0
    %v235 = vadd.f32 %v162, %v234
    %236 = vmatmul.f32.gmra.mxu0 %v180
    %v237 = vpop.f32.mrf.mxu0
    %v238 = vadd.f32 %v167, %v237
    %239 = vdwg.mxu0
    %v240 = vmax.f32 %v200, 0.0
    %v241 = vmax.f32 %v229, 0.0
    %v242 = vmax.f32 %v203, 0.0
    %v243 = vmax.f32 %v232, 0.0
    %v244 = vmax.f32 %v206, 0.0
    %v245 = vmax.f32 %v235, 0.0
    %v246 = vmax.f32 %v209, 0.0
    %v247 = vmax.f32 %v238, 0.0
    %v248 = vld [vmem:[%s5] sm:$0xff]
    %v249 = vld [vmem:[%s5 + $0x8] sm:$0xff]
    %v250 = vld [vmem:[%s6] sm:$0xff]
    %v251 = vld [vmem:[%s6 + $0x8] sm:$0xff]
    %253 = vset.pattern.permute.xlu0 0
    %254 = vperm.xlu0 %253, %v250
    %v255 = vpop.permute.xlu0 %254
    %258 = vset.pattern.permute.xlu0 0
    %259 = vperm.xlu0 %258, %v251
    %v260 = vpop.permute.xlu0 %259
    %v263 = vsel %vm169, %v248, 0
    %v266 = vsel %vm169, %v249, 0
    %268 = vmatpush.msra.mxu0 0.0
    %269 = vmatpush.msra.mxu0 0.0
    %270 = vmatpush.msra.mxu0 0.0
    %271 = vmatpush.msra.mxu0 0.0
    %272 = vmatpush.msra.mxu0 0.0
    %273 = vmatpush.msra.mxu0 0.0
    %274 = vmatpush.msra.mxu0 0.0
    %275 = vmatpush.msra.mxu0 0.0
    %276 = vmatpush.msra.mxu0 0.0
    %277 = vmatpush.msra.mxu0 0.0
    %278 = vmatpush.msra.mxu0 0.0
    %279 = vmatpush.msra.mxu0 0.0
    %280 = vmatpush.msra.mxu0 %v246
    %281 = vmatpush.msra.mxu0 %v244
    %282 = vmatpush.msra.mxu0 %v242
    %283 = vmatpush.msra.mxu0 %v240
    %284 = vmatmul.f32.gmra.mxu0 %v263
    %v285 = vpop.f32.mrf.mxu0
    %v286 = vadd.f32 %v255, %v285
    %287 = vmatmul.f32.gmra.mxu0 %v266
    %v288 = vpop.f32.mrf.mxu0
    %v289 = vadd.f32 %v260, %v288
    %290 = vdwg.mxu0
    %291 = vmatpush.msra.mxu0 0.0
    %292 = vmatpush.msra.mxu0 0.0
    %293 = vmatpush.msra.mxu0 0.0
    %294 = vmatpush.msra.mxu0 0.0
    %295 = vmatpush.msra.mxu0 0.0
    %296 = vmatpush.msra.mxu0 0.0
    %297 = vmatpush.msra.mxu0 0.0
    %298 = vmatpush.msra.mxu0 0.0
    %299 = vmatpush.msra.mxu0 0.0
    %300 = vmatpush.msra.mxu0 0.0
    %301 = vmatpush.msra.mxu0 0.0
    %302 = vmatpush.msra.mxu0 0.0
    %303 = vmatpush.msra.mxu0 %v247
    %304 = vmatpush.msra.mxu0 %v245
    %305 = vmatpush.msra.mxu0 %v243
    %306 = vmatpush.msra.mxu0 %v241
    %307 = vmatmul.f32.gmra.mxu0 %v263
    %v308 = vpop.f32.mrf.mxu0
    %v309 = vadd.f32 %v255, %v308
    %310 = vmatmul.f32.gmra.mxu0 %v266
    %v311 = vpop.f32.mrf.mxu0
    %v312 = vadd.f32 %v260, %v311
    %313 = vdwg.mxu0
    %v314 = vmax.f32 %v289, -2.0
    %v315 = vmax.f32 %v312, -2.0
    %v316 = vmin.f32 %v314, 3.0
    %v317 = vmin.f32 %v315, 3.0
    %v318 = vsub.f32 %v30, %v286
    %v319 = vsub.f32 %v31, %v309
    %v320 = vsub.f32 0.0, %v316
    %v321 = vsub.f32 0.0, %v317
    %v322 = vmul.f32 %v320, 1.442695
    %v323 = vpow.pop %v322
    %v324 = vmul.f32 %v321, 1.442695
    %v325 = vpow.pop %v324
    %v326 = vmul.f32 %v318, %v323
    %v327 = vmul.f32 %v319, %v325
    %328 = vst [vmem:[#allocation2] sm:$0xff] %v326
    %329 = vst [vmem:[#allocation2 + $0x8] sm:$0xff] %v327
    %330 = vst [vmem:[#allocation4] sm:$0xff] %v320
    %331 = vst [vmem:[#allocation4 + $0x8] sm:$0xff] %v321
    // Predicated region
    $region30: #{tpu_custom_call.1} parent=1 // pred_check
      _
    $region31: #{tpu_custom_call.1} parent=1 // pred_check_branch
      %333 = sbr.rel (0) target = $region33
    $region32: #{tpu_custom_call.1} parent=1 // pred_region
      %335 = vsyncadd [#allocation3], 0
      %s337 = sshll.u32 [#allocation2], 4
      %s338 = int_to_ptr.vmem [resolvable:$true] %s337
      %s339 = sshll.u32 %s7, 4
      %s340 = int_to_ptr.hbm [resolvable:$true] %s339
      %342 = dma.vmem_to_hbm [thread:$0]  %s338, 256, %s340, [#allocation3]
    $region33: #{tpu_custom_call.1} parent=1 // pred_fallthru
      _
    // Predicated region
    $region34: #{tpu_custom_call.1} parent=1 // pred_check
      _
    $region35: #{tpu_custom_call.1} parent=1 // pred_check_branch
      %344 = sbr.rel (0) target = $region37
    $region36: #{tpu_custom_call.1} parent=1 // pred_region
      %346 = vsyncadd [#allocation5], 0
      %s348 = sshll.u32 [#allocation4], 4
      %s349 = int_to_ptr.vmem [resolvable:$true] %s348
      %s350 = sshll.u32 %s8, 4
      %s351 = int_to_ptr.hbm [resolvable:$true] %s350
      %353 = dma.vmem_to_hbm [thread:$0]  %s349, 256, %s351, [#allocation5]
    $region37: #{tpu_custom_call.1} parent=1 // pred_fallthru
      _
    // Predicated region
    $region38: #{tpu_custom_call.1} parent=1 // pred_check
      _
    $region39: #{tpu_custom_call.1} parent=1 // pred_check_branch
      %355 = sbr.rel (0) target = $region41
    $region40: #{tpu_custom_call.1} parent=1 // pred_region
      %357 = dma.done [#allocation3], 256
    $region41: #{tpu_custom_call.1} parent=1 // pred_fallthru
      _
    // Predicated region
    $region42: #{tpu_custom_call.1} parent=1 // pred_check
      _
    $region43: #{tpu_custom_call.1} parent=1 // pred_check_branch
      %359 = sbr.rel (0) target = $region45
    $region44: #{tpu_custom_call.1} parent=1 // pred_region
      %361 = dma.done [#allocation5], 256
    $region45: #{tpu_custom_call.1} parent=1 // pred_fallthru
      _
    %362 = vsyncpa [#allocation3], 1
    %363 = vsyncpa [#allocation5], 1

</llo_original>
